<compile_context>
chip_gen: v7x
topology: tpu7x:2x2x1
jax: 0.10.0
libtpu: 0.0.40
codegen_flags: <defaults>
</compile_context>

<pallas_src>
import functools

import jax
import jax.numpy as jnp
from jax.experimental import pallas as pl
from jax.experimental.pallas import tpu as pltpu

NUM_ATOMS = 51
NUM_ACTIONS = 2
IN_FEATURES = 4
H1 = 128
H2 = 128
H3 = 64
PAD = 128                        # lane-aligned padded width per action block
OUT_PAD = NUM_ACTIONS * PAD      # kernel output slab width (256)
NEG_INF = -1e30                  # pre-masks padding atom lanes via the bias

MATMUL_IN_DTYPE = jnp.bfloat16   # MXU-native on v5e/v6e/v7x; f32 accumulation
OUT_DTYPE = jnp.bfloat16         # halves output HBM writeback; wrapper returns f32


def rainbow_kernel(x_ref, w1_ref, b1_ref, w2_ref, b2_ref,
                   wh1_ref, bh1_ref, wh2_ref, bh2_ref, out_ref):
    x = x_ref[...]                                          # (TM, 4) f32

    # ---- layer 1: Linear(4, 128) on the VPU (a K=4 MXU pass is wasteful) ---
    h = b1_ref[...] + x[:, 0:1] * w1_ref[0:1, :]
    for k in range(1, IN_FEATURES):                         # unrolled, static
        h = h + x[:, k:k + 1] * w1_ref[k:k + 1, :]
    h = jnp.maximum(h, 0.0)                                 # (TM, 128) f32

    def mm(a, w_ref, b_ref):
        # weights already bf16 (pre-cast at fuse time); bias stays f32
        return jnp.dot(a.astype(MATMUL_IN_DTYPE), w_ref[...],
                       preferred_element_type=jnp.float32) + b_ref[...]

    # ---- layer 2: Linear(128, 128) + ReLU ---------------------------------
    h = jnp.maximum(mm(h, w2_ref, b2_ref), 0.0)             # (TM, 128)

    # ---- fused head layer 1: [NoisyLinear(128,64)] x2 + ReLU --------------
    # cols 0..63 = value-head hidden, cols 64..127 = advantage-head hidden
    hh = jnp.maximum(mm(h, wh1_ref, bh1_ref), 0.0)          # (TM, 128)

    # ---- fused head layer 2 with dueling combine folded into the weights --
    # lanes   0.. 50 of block 0: q0 = s + 0.5*(a0 - a1)
    # lanes 128..178 of block 1: q1 = s - 0.5*(a0 - a1)
    # padding lanes carry bias -1e30 -> exp underflows to exactly 0
    q = mm(hh, wh2_ref, bh2_ref)                            # (TM, 256) f32

    def softmax_block(z):
        z = z - jnp.max(z, axis=-1, keepdims=True)
        e = jnp.exp(z)                                      # padding lanes -> 0
        return e / jnp.sum(e, axis=-1, keepdims=True)       # exact normalization

    # lane-dense, 128-aligned stores (no masked partial vst)
    out_ref[:, 0:PAD] = softmax_block(q[:, 0:PAD]).astype(out_ref.dtype)
    out_ref[:, PAD:2 * PAD] = softmax_block(q[:, PAD:2 * PAD]).astype(out_ref.dtype)


def _round_up(n, m):
    return ((n + m - 1) // m) * m


def _cdiv(a, b):
    return -(-a // b)


def _choose_tile(B, block_batch):
    """Pick (tile_rows, grid_steps) minimizing pad waste; >=2 steps for v7x."""
    n_steps = max(_cdiv(B, block_batch), 1)
    if n_steps == 1 and B > 256:
        n_steps = 2          # let v7x's two TensorCores split the batch
    tm = _round_up(_cdiv(B, n_steps), 16)   # 16: bf16-friendly sublane multiple
    return tm, n_steps


def _resident_spec(arr):
    # Full-array block with constant block index -> stays resident in VMEM.
    # (arr bound as a function argument: no late-binding closure bug.)
    return pl.BlockSpec(arr.shape, lambda i: (0, 0))


@functools.partial(jax.jit, static_argnames=("block_batch",))
def rainbow_forward(x, fused, *, block_batch=1024):
    """x: (B, 4) f32 -> (B, 2, 51) per-action categorical distributions (f32)."""
    B = x.shape[0]
    tm, n_steps = _choose_tile(B, block_batch)
    Bp = tm * n_steps
    if Bp != B:
        x = jnp.pad(x, ((0, Bp - B), (0, 0)))

    weights = (fused["w1"], fused["b1"], fused["w2"], fused["b2"],
               fused["wh1"], fused["bh1"], fused["wh2"], fused["bh2"])

    grid_spec = pltpu.PrefetchScalarGridSpec(
        num_scalar_prefetch=0,
        grid=(n_steps,),
        in_specs=[pl.BlockSpec((tm, IN_FEATURES), lambda i: (i, 0))]
                 + [_resident_spec(w) for w in weights],
        out_specs=pl.BlockSpec((tm, OUT_PAD), lambda i: (i, 0)),
    )

    out = pl.pallas_call(
        rainbow_kernel,
        out_shape=jax.ShapeDtypeStruct((Bp, OUT_PAD), OUT_DTYPE),
        grid_spec=grid_spec,
        compiler_params=pltpu.CompilerParams(
            dimension_semantics=("parallel",)),
    )(x, *weights)

    # (Bp, 256) -> (B, 2, 128) reshape (free, row-major) -> slice valid atoms
    q = out[:B].reshape(B, NUM_ACTIONS, PAD)[:, :, :NUM_ATOMS]
    return q.astype(jnp.float32)


def init_params(key):
    """PyTorch-Linear-style init; weights stored (in, out)."""
    def linear(k, fan_in, fan_out):
        k1, k2 = jax.random.split(k)
        bound = 1.0 / jnp.sqrt(jnp.float32(fan_in))
        w = jax.random.uniform(k1, (fan_in, fan_out), jnp.float32, -bound, bound)
        b = jax.random.uniform(k2, (1, fan_out), jnp.float32, -bound, bound)
        return w, b

    keys = jax.random.split(key, 6)
    w1, b1 = linear(keys[0], IN_FEATURES, H1)
    w2, b2 = linear(keys[1], H1, H2)
    ws1, bs1 = linear(keys[2], H2, H3)
    ws2, bs2 = linear(keys[3], H3, NUM_ATOMS)
    wa1, ba1 = linear(keys[4], H2, H3)
    wa2, ba2 = linear(keys[5], H3, NUM_ACTIONS * NUM_ATOMS)
    return dict(w1=w1, b1=b1, w2=w2, b2=b2,
                ws1=ws1, bs1=bs1, ws2=ws2, bs2=bs2,
                wa1=wa1, ba1=ba1, wa2=wa2, ba2=ba2)


def fuse_params(p):
    """Fold heads + dueling combine into 128-lane-aligned kernel weights.

    q0 = s + 0.5*(a0 - a1),  q1 = s - 0.5*(a0 - a1)   (exactly the reference
    dueling combine with 2 actions), so the second head matmul can emit the
    two q blocks directly.  Padding atom lanes get bias -1e30 (pre-masked
    softmax).  Matmul weights are pre-cast to bf16; biases stay f32.
    """
    wh1 = jnp.concatenate([p["ws1"], p["wa1"]], axis=1)              # (128, 128)
    bh1 = jnp.concatenate([p["bs1"], p["ba1"]], axis=1)              # (1, 128)

    wa2_0 = p["wa2"][:, :NUM_ATOMS]                                  # (64, 51)
    wa2_1 = p["wa2"][:, NUM_ATOMS:]
    ba2_0 = p["ba2"][:, :NUM_ATOMS]
    ba2_1 = p["ba2"][:, NUM_ATOMS:]
    wd = 0.5 * (wa2_0 - wa2_1)
    bd = 0.5 * (ba2_0 - ba2_1)

    wh2 = jnp.zeros((2 * H3, 2 * PAD), jnp.float32)                  # (128, 256)
    wh2 = wh2.at[0:H3, 0:NUM_ATOMS].set(p["ws2"])                    # q0: s part
    wh2 = wh2.at[H3:, 0:NUM_ATOMS].set(wd)                           # q0: +0.5*(a0-a1)
    wh2 = wh2.at[0:H3, PAD:PAD + NUM_ATOMS].set(p["ws2"])            # q1: s part
    wh2 = wh2.at[H3:, PAD:PAD + NUM_ATOMS].set(-wd)                  # q1: -0.5*(a0-a1)

    bh2 = jnp.full((1, 2 * PAD), NEG_INF, jnp.float32)               # mask padding lanes
    bh2 = bh2.at[:, 0:NUM_ATOMS].set(p["bs2"] + bd)
    bh2 = bh2.at[:, PAD:PAD + NUM_ATOMS].set(p["bs2"] - bd)

    return dict(
        w1=p["w1"], b1=p["b1"],                                      # layer 1 stays f32 (VPU)
        w2=p["w2"].astype(MATMUL_IN_DTYPE), b2=p["b2"],
        wh1=wh1.astype(MATMUL_IN_DTYPE), bh1=bh1,
        wh2=wh2.astype(MATMUL_IN_DTYPE), bh2=bh2)


def reference_forward(x, p):
    """Pure-JAX f32 reference with the original module's semantics."""
    h = jnp.maximum(x @ p["w1"] + p["b1"], 0.0)
    h = jnp.maximum(h @ p["w2"] + p["b2"], 0.0)
    s = jnp.maximum(h @ p["ws1"] + p["bs1"], 0.0) @ p["ws2"] + p["bs2"]
    a = jnp.maximum(h @ p["wa1"] + p["ba1"], 0.0) @ p["wa2"] + p["ba2"]
    s = s.reshape(-1, 1, NUM_ATOMS)
    a = a.reshape(-1, NUM_ACTIONS, NUM_ATOMS)
    q = s + a - a.mean(axis=1, keepdims=True)
    return jax.nn.softmax(q, axis=2)


if __name__ == "__main__":
    key = jax.random.PRNGKey(0)
    pkey, xkey, xkey2 = jax.random.split(key, 3)
    params = init_params(pkey)
    fused = fuse_params(params)

    # small test (B=2), matching the module's inference use case
    B = 2
    x = jax.random.normal(xkey, (B, IN_FEATURES), jnp.float32)
    q = jax.block_until_ready(rainbow_forward(x, fused))
    q_ref = reference_forward(x, params)
    assert q.shape == (B, NUM_ACTIONS, NUM_ATOMS)
    err = float(jnp.max(jnp.abs(q - q_ref)))
    assert err < 5e-3, err                                   # bf16 matmul/store tolerance
    assert jnp.allclose(q.sum(axis=2), 1.0, atol=5e-3)       # exact-normalized softmax

    # larger batch exercising the multi-step parallel grid + tail padding
    B2 = 333
    x2 = jax.random.normal(xkey2, (B2, IN_FEATURES), jnp.float32)
    q2 = jax.block_until_ready(rainbow_forward(x2, fused))
    q2_ref = reference_forward(x2, params)
    assert q2.shape == (B2, NUM_ACTIONS, NUM_ATOMS)
    err2 = float(jnp.max(jnp.abs(q2 - q2_ref)))
    assert err2 < 5e-3, err2
    assert jnp.allclose(q2.sum(axis=2), 1.0, atol=5e-3)

    print("KERNEL_OK")
</pallas_src>

<mosaic_0001>
module attributes {stable_mosaic.version = 11 : i64} {
  func.func @rainbow_kernel(%arg0: i32, %arg1: memref<16x4xf32, #tpu.memory_space<vmem>>, %arg2: memref<4x128xf32, #tpu.memory_space<vmem>>, %arg3: memref<1x128xf32, #tpu.memory_space<vmem>>, %arg4: memref<128x128xbf16, #tpu.memory_space<vmem>>, %arg5: memref<1x128xf32, #tpu.memory_space<vmem>>, %arg6: memref<128x128xbf16, #tpu.memory_space<vmem>>, %arg7: memref<1x128xf32, #tpu.memory_space<vmem>>, %arg8: memref<128x256xbf16, #tpu.memory_space<vmem>>, %arg9: memref<1x256xf32, #tpu.memory_space<vmem>>, %arg10: memref<16x256xbf16, #tpu.memory_space<vmem>>) attributes {dimension_semantics = [#tpu.dimension_semantics<parallel>], iteration_bounds = array<i64: 1>, scalar_prefetch = 0 : i64, scratch_operands = 0 : i64, tpu.core_type = #tpu.core_type<tc>, window_params = [{transform_indices = @transform_0, window_bounds = array<i64: 16, 4>}, {pipeline_mode = #tpu.pipeline_mode<synchronous>, transform_indices = @transform_1, window_bounds = array<i64: 4, 128>}, {pipeline_mode = #tpu.pipeline_mode<synchronous>, transform_indices = @transform_2, window_bounds = array<i64: 1, 128>}, {pipeline_mode = #tpu.pipeline_mode<synchronous>, transform_indices = @transform_3, window_bounds = array<i64: 128, 128>}, {pipeline_mode = #tpu.pipeline_mode<synchronous>, transform_indices = @transform_4, window_bounds = array<i64: 1, 128>}, {pipeline_mode = #tpu.pipeline_mode<synchronous>, transform_indices = @transform_5, window_bounds = array<i64: 128, 128>}, {pipeline_mode = #tpu.pipeline_mode<synchronous>, transform_indices = @transform_6, window_bounds = array<i64: 1, 128>}, {pipeline_mode = #tpu.pipeline_mode<synchronous>, transform_indices = @transform_7, window_bounds = array<i64: 128, 256>}, {pipeline_mode = #tpu.pipeline_mode<synchronous>, transform_indices = @transform_8, window_bounds = array<i64: 1, 256>}, {transform_indices = @transform_9, window_bounds = array<i64: 16, 256>}]} {
    %c0 = arith.constant 0 : index
    %c0_0 = arith.constant 0 : index
    %0 = vector.load %arg1[%c0, %c0_0] : memref<16x4xf32, #tpu.memory_space<vmem>>, vector<16x4xf32>
    %c0_1 = arith.constant 0 : index
    %c0_2 = arith.constant 0 : index
    %1 = vector.load %arg3[%c0_1, %c0_2] : memref<1x128xf32, #tpu.memory_space<vmem>>, vector<1x128xf32>
    %2 = vector.extract_strided_slice %0 {offsets = [0, 0], sizes = [16, 1], strides = [1, 1]} : vector<16x4xf32> to vector<16x1xf32>
    %c0_3 = arith.constant 0 : index
    %c0_4 = arith.constant 0 : index
    %3 = vector.load %arg2[%c0_3, %c0_4] : memref<4x128xf32, #tpu.memory_space<vmem>>, vector<1x128xf32>
    %4 = vector.broadcast %2 : vector<16x1xf32> to vector<16x128xf32>
    %5 = vector.broadcast %3 : vector<1x128xf32> to vector<16x128xf32>
    %6 = arith.mulf %4, %5 : vector<16x128xf32>
    %7 = vector.broadcast %1 : vector<1x128xf32> to vector<16x128xf32>
    %8 = arith.addf %7, %6 : vector<16x128xf32>
    %9 = vector.extract_strided_slice %0 {offsets = [0, 1], sizes = [16, 1], strides = [1, 1]} : vector<16x4xf32> to vector<16x1xf32>
    %c1 = arith.constant 1 : index
    %c0_5 = arith.constant 0 : index
    %10 = vector.load %arg2[%c1, %c0_5] : memref<4x128xf32, #tpu.memory_space<vmem>>, vector<1x128xf32>
    %11 = vector.broadcast %9 : vector<16x1xf32> to vector<16x128xf32>
    %12 = vector.broadcast %10 : vector<1x128xf32> to vector<16x128xf32>
    %13 = arith.mulf %11, %12 : vector<16x128xf32>
    %14 = arith.addf %8, %13 : vector<16x128xf32>
    %15 = vector.extract_strided_slice %0 {offsets = [0, 2], sizes = [16, 1], strides = [1, 1]} : vector<16x4xf32> to vector<16x1xf32>
    %c2 = arith.constant 2 : index
    %c0_6 = arith.constant 0 : index
    %16 = vector.load %arg2[%c2, %c0_6] : memref<4x128xf32, #tpu.memory_space<vmem>>, vector<1x128xf32>
    %17 = vector.broadcast %15 : vector<16x1xf32> to vector<16x128xf32>
    %18 = vector.broadcast %16 : vector<1x128xf32> to vector<16x128xf32>
    %19 = arith.mulf %17, %18 : vector<16x128xf32>
    %20 = arith.addf %14, %19 : vector<16x128xf32>
    %21 = vector.extract_strided_slice %0 {offsets = [0, 3], sizes = [16, 1], strides = [1, 1]} : vector<16x4xf32> to vector<16x1xf32>
    %c3 = arith.constant 3 : index
    %c0_7 = arith.constant 0 : index
    %22 = vector.load %arg2[%c3, %c0_7] : memref<4x128xf32, #tpu.memory_space<vmem>>, vector<1x128xf32>
    %23 = vector.broadcast %21 : vector<16x1xf32> to vector<16x128xf32>
    %24 = vector.broadcast %22 : vector<1x128xf32> to vector<16x128xf32>
    %25 = arith.mulf %23, %24 : vector<16x128xf32>
    %26 = arith.addf %20, %25 : vector<16x128xf32>
    %cst = arith.constant 0.000000e+00 : f32
    %27 = vector.broadcast %cst : f32 to vector<16x128xf32>
    %28 = arith.maximumf %26, %27 : vector<16x128xf32>
    %29 = arith.truncf %28 : vector<16x128xf32> to vector<16x128xbf16>
    %c0_8 = arith.constant 0 : index
    %c0_9 = arith.constant 0 : index
    %30 = vector.load %arg4[%c0_8, %c0_9] : memref<128x128xbf16, #tpu.memory_space<vmem>>, vector<128x128xbf16>
    %cst_10 = arith.constant dense<0.000000e+00> : vector<16x128xf32>
    %31 = tpu.matmul %29, %30, %cst_10 {dimension_numbers = #tpu.dot_dimension_numbers<[1], [0], [0], [1], [0, 0, 1, 1], [], []>} : vector<16x128xbf16>, vector<128x128xbf16>, vector<16x128xf32> -> vector<16x128xf32>
    %c0_11 = arith.constant 0 : index
    %c0_12 = arith.constant 0 : index
    %32 = vector.load %arg5[%c0_11, %c0_12] : memref<1x128xf32, #tpu.memory_space<vmem>>, vector<1x128xf32>
    %33 = vector.broadcast %32 : vector<1x128xf32> to vector<16x128xf32>
    %34 = arith.addf %31, %33 : vector<16x128xf32>
    %cst_13 = arith.constant 0.000000e+00 : f32
    %35 = vector.broadcast %cst_13 : f32 to vector<16x128xf32>
    %36 = arith.maximumf %34, %35 : vector<16x128xf32>
    %37 = arith.truncf %36 : vector<16x128xf32> to vector<16x128xbf16>
    %c0_14 = arith.constant 0 : index
    %c0_15 = arith.constant 0 : index
    %38 = vector.load %arg6[%c0_14, %c0_15] : memref<128x128xbf16, #tpu.memory_space<vmem>>, vector<128x128xbf16>
    %cst_16 = arith.constant dense<0.000000e+00> : vector<16x128xf32>
    %39 = tpu.matmul %37, %38, %cst_16 {dimension_numbers = #tpu.dot_dimension_numbers<[1], [0], [0], [1], [0, 0, 1, 1], [], []>} : vector<16x128xbf16>, vector<128x128xbf16>, vector<16x128xf32> -> vector<16x128xf32>
    %c0_17 = arith.constant 0 : index
    %c0_18 = arith.constant 0 : index
    %40 = vector.load %arg7[%c0_17, %c0_18] : memref<1x128xf32, #tpu.memory_space<vmem>>, vector<1x128xf32>
    %41 = vector.broadcast %40 : vector<1x128xf32> to vector<16x128xf32>
    %42 = arith.addf %39, %41 : vector<16x128xf32>
    %cst_19 = arith.constant 0.000000e+00 : f32
    %43 = vector.broadcast %cst_19 : f32 to vector<16x128xf32>
    %44 = arith.maximumf %42, %43 : vector<16x128xf32>
    %45 = arith.truncf %44 : vector<16x128xf32> to vector<16x128xbf16>
    %c0_20 = arith.constant 0 : index
    %c0_21 = arith.constant 0 : index
    %46 = vector.load %arg8[%c0_20, %c0_21] : memref<128x256xbf16, #tpu.memory_space<vmem>>, vector<128x256xbf16>
    %cst_22 = arith.constant dense<0.000000e+00> : vector<16x256xf32>
    %47 = tpu.matmul %45, %46, %cst_22 {dimension_numbers = #tpu.dot_dimension_numbers<[1], [0], [0], [1], [0, 0, 1, 1], [], []>} : vector<16x128xbf16>, vector<128x256xbf16>, vector<16x256xf32> -> vector<16x256xf32>
    %c0_23 = arith.constant 0 : index
    %c0_24 = arith.constant 0 : index
    %48 = vector.load %arg9[%c0_23, %c0_24] : memref<1x256xf32, #tpu.memory_space<vmem>>, vector<1x256xf32>
    %49 = vector.broadcast %48 : vector<1x256xf32> to vector<16x256xf32>
    %50 = arith.addf %47, %49 : vector<16x256xf32>
    %51 = vector.extract_strided_slice %50 {offsets = [0, 0], sizes = [16, 128], strides = [1, 1]} : vector<16x256xf32> to vector<16x128xf32>
    %cst_25 = arith.constant dense<0xFF800000> : vector<16xf32>
    %52 = vector.multi_reduction <maximumf>, %51, %cst_25 [1] : vector<16x128xf32> to vector<16xf32>
    %53 = vector.shape_cast %52 : vector<16xf32> to vector<16x1xf32>
    %54 = vector.broadcast %53 : vector<16x1xf32> to vector<16x128xf32>
    %55 = arith.subf %51, %54 : vector<16x128xf32>
    %56 = math.exp %55 : vector<16x128xf32>
    %cst_26 = arith.constant dense<0.000000e+00> : vector<16xf32>
    %57 = vector.multi_reduction <add>, %56, %cst_26 [1] : vector<16x128xf32> to vector<16xf32>
    %58 = vector.shape_cast %57 : vector<16xf32> to vector<16x1xf32>
    %59 = vector.broadcast %58 : vector<16x1xf32> to vector<16x128xf32>
    %60 = arith.divf %56, %59 : vector<16x128xf32>
    %61 = arith.truncf %60 : vector<16x128xf32> to vector<16x128xbf16>
    %c0_27 = arith.constant 0 : index
    %c0_28 = arith.constant 0 : index
    %62 = vector.load %arg10[%c0_27, %c0_28] : memref<16x256xbf16, #tpu.memory_space<vmem>>, vector<16x128xbf16>
    tpu.vector_store %arg10[%c0_27, %c0_28], %61 {strides = array<i32>} : memref<16x256xbf16, #tpu.memory_space<vmem>>, vector<16x128xbf16>,
    %63 = vector.extract_strided_slice %50 {offsets = [0, 128], sizes = [16, 128], strides = [1, 1]} : vector<16x256xf32> to vector<16x128xf32>
    %cst_29 = arith.constant dense<0xFF800000> : vector<16xf32>
    %64 = vector.multi_reduction <maximumf>, %63, %cst_29 [1] : vector<16x128xf32> to vector<16xf32>
    %65 = vector.shape_cast %64 : vector<16xf32> to vector<16x1xf32>
    %66 = vector.broadcast %65 : vector<16x1xf32> to vector<16x128xf32>
    %67 = arith.subf %63, %66 : vector<16x128xf32>
    %68 = math.exp %67 : vector<16x128xf32>
    %cst_30 = arith.constant dense<0.000000e+00> : vector<16xf32>
    %69 = vector.multi_reduction <add>, %68, %cst_30 [1] : vector<16x128xf32> to vector<16xf32>
    %70 = vector.shape_cast %69 : vector<16xf32> to vector<16x1xf32>
    %71 = vector.broadcast %70 : vector<16x1xf32> to vector<16x128xf32>
    %72 = arith.divf %68, %71 : vector<16x128xf32>
    %73 = arith.truncf %72 : vector<16x128xf32> to vector<16x128xbf16>
    %c0_31 = arith.constant 0 : index
    %c128 = arith.constant 128 : index
    %74 = vector.load %arg10[%c0_31, %c128] : memref<16x256xbf16, #tpu.memory_space<vmem>>, vector<16x128xbf16>
    tpu.vector_store %arg10[%c0_31, %c128], %73 {strides = array<i32>} : memref<16x256xbf16, #tpu.memory_space<vmem>>, vector<16x128xbf16>,
    return
  }
  func.func @transform_0(%arg0: i32) -> (i32, i32) {
    %c0_i32 = arith.constant 0 : i32
    %c0_i32_0 = arith.constant 0 : i32
    return %arg0, %c0_i32 : i32, i32
  }
  func.func @transform_1(%arg0: i32) -> (i32, i32) {
    %c0_i32 = arith.constant 0 : i32
    %c0_i32_0 = arith.constant 0 : i32
    %c0_i32_1 = arith.constant 0 : i32
    return %c0_i32, %c0_i32_0 : i32, i32
  }
  func.func @transform_2(%arg0: i32) -> (i32, i32) {
    %c0_i32 = arith.constant 0 : i32
    %c0_i32_0 = arith.constant 0 : i32
    %c0_i32_1 = arith.constant 0 : i32
    return %c0_i32, %c0_i32_0 : i32, i32
  }
  func.func @transform_3(%arg0: i32) -> (i32, i32) {
    %c0_i32 = arith.constant 0 : i32
    %c0_i32_0 = arith.constant 0 : i32
    %c0_i32_1 = arith.constant 0 : i32
    return %c0_i32, %c0_i32_0 : i32, i32
  }
  func.func @transform_4(%arg0: i32) -> (i32, i32) {
    %c0_i32 = arith.constant 0 : i32
    %c0_i32_0 = arith.constant 0 : i32
    %c0_i32_1 = arith.constant 0 : i32
    return %c0_i32, %c0_i32_0 : i32, i32
  }
  func.func @transform_5(%arg0: i32) -> (i32, i32) {
    %c0_i32 = arith.constant 0 : i32
    %c0_i32_0 = arith.constant 0 : i32
    %c0_i32_1 = arith.constant 0 : i32
    return %c0_i32, %c0_i32_0 : i32, i32
  }
  func.func @transform_6(%arg0: i32) -> (i32, i32) {
    %c0_i32 = arith.constant 0 : i32
    %c0_i32_0 = arith.constant 0 : i32
    %c0_i32_1 = arith.constant 0 : i32
    return %c0_i32, %c0_i32_0 : i32, i32
  }
  func.func @transform_7(%arg0: i32) -> (i32, i32) {
    %c0_i32 = arith.constant 0 : i32
    %c0_i32_0 = arith.constant 0 : i32
    %c0_i32_1 = arith.constant 0 : i32
    return %c0_i32, %c0_i32_0 : i32, i32
  }
  func.func @transform_8(%arg0: i32) -> (i32, i32) {
    %c0_i32 = arith.constant 0 : i32
    %c0_i32_0 = arith.constant 0 : i32
    %c0_i32_1 = arith.constant 0 : i32
    return %c0_i32, %c0_i32_0 : i32, i32
  }
  func.func @transform_9(%arg0: i32) -> (i32, i32) {
    %c0_i32 = arith.constant 0 : i32
    %c0_i32_0 = arith.constant 0 : i32
    return %arg0, %c0_i32 : i32, i32
  }
}

</mosaic_0001>

<llo_original>
// kernel: rainbow_forward.1
$region0: #{rainbow_forward.1}
  #allocation0 [shape = 'u32[]', space=smem, size = 0x4, offset = 0x4, fixed_abs, tag = 'smem constant byte address 0x4 - core index']
  #allocation1 [shape = 'u32[144,128]{1,0:T(1,128)}', space=vmem, size = 0x12000, scoped, tag = 'internal scratch']
  %s0 = inlined_call_operand.vmem [shape: f32[16,4], index: 0, kind: input, shape index: {}]
  %s1 = inlined_call_operand.vmem [shape: f32[4,128], index: 1, kind: input, shape index: {}]
  %s2 = inlined_call_operand.vmem [shape: f32[1,128], index: 2, kind: input, shape index: {}]
  %s3 = inlined_call_operand.hbm [shape: bf16[128,128], index: 3, kind: input, shape index: {}]
  %s4 = inlined_call_operand.vmem [shape: f32[1,128], index: 4, kind: input, shape index: {}]
  %s5 = inlined_call_operand.hbm [shape: bf16[128,128], index: 5, kind: input, shape index: {}]
  %s6 = inlined_call_operand.vmem [shape: f32[1,128], index: 6, kind: input, shape index: {}]
  %s7 = inlined_call_operand.hbm [shape: bf16[128,256], index: 7, kind: input, shape index: {}]
  %s8 = inlined_call_operand.vmem [shape: f32[1,256], index: 8, kind: input, shape index: {}]
  %s9 = inlined_call_operand.vmem [shape: bf16[16,256], index: 9, kind: output, shape index: {}]
  %s10 = sld [smem:[#allocation0]]
  $region58: #{rainbow_forward.1} parent=0
    _
  %s12 = ssub.s32 1, %s10
  %s13 = scalar_select 0, %s12, %s10
  $region1: #{rainbow_forward.1} parent=0
    #allocation2 [shape = 'u8[32768]{0}', space=vmem, size = 0x8000, scoped, tag = 'input window, operand 3, single buffered']
    #allocation3 [shape = 's32[1]{0}', space=sflag, size = 0x4, scoped, tag = 'scoped memory for rainbow_forward.1']
    #allocation4 [shape = 'u8[32768]{0}', space=vmem, size = 0x8000, scoped, tag = 'input window, operand 5, single buffered']
    #allocation5 [shape = 's32[1]{0}', space=sflag, size = 0x4, scoped, tag = 'scoped memory for rainbow_forward.1']
    #allocation6 [shape = 'u8[65536]{0}', space=vmem, size = 0x10000, scoped, tag = 'input window, operand 7, single buffered']
    %14 = vsyncpa [#allocation3], 0
    %15 = vsyncpa [#allocation5], 0
    // Predicated region
    $region2: #{rainbow_forward.1} parent=1 // pred_check
      _
    $region3: #{rainbow_forward.1} parent=1 // pred_check_branch
      %17 = sbr.rel (0) target = $region5
    $region4: #{rainbow_forward.1} parent=1 // pred_region
      _
    $region5: #{rainbow_forward.1} parent=1 // pred_fallthru
      _
    // Predicated region
    $region6: #{rainbow_forward.1} parent=1 // pred_check
      _
    $region7: #{rainbow_forward.1} parent=1 // pred_check_branch
      %19 = sbr.rel (0) target = $region9
    $region8: #{rainbow_forward.1} parent=1 // pred_region
      _
    $region9: #{rainbow_forward.1} parent=1 // pred_fallthru
      _
    // Predicated region
    $region10: #{rainbow_forward.1} parent=1 // pred_check
      _
    $region11: #{rainbow_forward.1} parent=1 // pred_check_branch
      %21 = sbr.rel (0) target = $region13
    $region12: #{rainbow_forward.1} parent=1 // pred_region
      _
    $region13: #{rainbow_forward.1} parent=1 // pred_fallthru
      _
    // Predicated region
    $region14: #{rainbow_forward.1} parent=1 // pred_check
      _
    $region15: #{rainbow_forward.1} parent=1 // pred_check_branch
      %23 = sbr.rel (0) target = $region17
    $region16: #{rainbow_forward.1} parent=1 // pred_region
      %s25 = ssub.s32 1024, 1024
      %26 = vsyncadd [#allocation3], %s25
      %s27 = sshll.u32 [#allocation2], 4
      %s28 = int_to_ptr.vmem [resolvable:$true] %s27
      %33 = dma.hbm_to_vmem [thread:$0]  %s3, 1024, %s28, [#allocation3], 64, 64, 4
    $region17: #{rainbow_forward.1} parent=1 // pred_fallthru
      _
    // Predicated region
    $region18: #{rainbow_forward.1} parent=1 // pred_check
      _
    $region19: #{rainbow_forward.1} parent=1 // pred_check_branch
      %35 = sbr.rel (0) target = $region21
    $region20: #{rainbow_forward.1} parent=1 // pred_region
      _
    $region21: #{rainbow_forward.1} parent=1 // pred_fallthru
      _
    // Predicated region
    $region22: #{rainbow_forward.1} parent=1 // pred_check
      _
    $region23: #{rainbow_forward.1} parent=1 // pred_check_branch
      %37 = sbr.rel (0) target = $region25
    $region24: #{rainbow_forward.1} parent=1 // pred_region
      %s39 = ssub.s32 1024, 1024
      %40 = vsyncadd [#allocation5], %s39
      %s41 = sshll.u32 [#allocation4], 4
      %s42 = int_to_ptr.vmem [resolvable:$true] %s41
      %47 = dma.hbm_to_vmem [thread:$0]  %s5, 1024, %s42, [#allocation5], 64, 64, 4
    $region25: #{rainbow_forward.1} parent=1 // pred_fallthru
      _
    // Predicated region
    $region26: #{rainbow_forward.1} parent=1 // pred_check
      _
    $region27: #{rainbow_forward.1} parent=1 // pred_check_branch
      %49 = sbr.rel (0) target = $region29
    $region28: #{rainbow_forward.1} parent=1 // pred_region
      _
    $region29: #{rainbow_forward.1} parent=1 // pred_fallthru
      _
    // Predicated region
    $region30: #{rainbow_forward.1} parent=1 // pred_check
      _
    $region31: #{rainbow_forward.1} parent=1 // pred_check_branch
      %51 = sbr.rel (0) target = $region33
    $region32: #{rainbow_forward.1} parent=1 // pred_region
      %s53 = ssub.s32 2048, 2048
      %54 = vsyncadd [#allocation5], %s53
      %s55 = sshll.u32 [#allocation6], 4
      %s56 = int_to_ptr.vmem [resolvable:$true] %s55
      %61 = dma.hbm_to_vmem [thread:$0]  %s7, 2048, %s56, [#allocation5], 128, 128, 8
    $region33: #{rainbow_forward.1} parent=1 // pred_fallthru
      _
    // Predicated region
    $region34: #{rainbow_forward.1} parent=1 // pred_check
      _
    $region35: #{rainbow_forward.1} parent=1 // pred_check_branch
      %63 = sbr.rel (0) target = $region37
    $region36: #{rainbow_forward.1} parent=1 // pred_region
      _
    $region37: #{rainbow_forward.1} parent=1 // pred_fallthru
      _
    // Predicated region
    $region38: #{rainbow_forward.1} parent=1 // pred_check
      _
    $region39: #{rainbow_forward.1} parent=1 // pred_check_branch
      %65 = sbr.rel (0) target = $region41
    $region40: #{rainbow_forward.1} parent=1 // pred_region
      %66 = dma.done [#allocation3], 1024
    $region41: #{rainbow_forward.1} parent=1 // pred_fallthru
      _
    // Predicated region
    $region42: #{rainbow_forward.1} parent=1 // pred_check
      _
    $region43: #{rainbow_forward.1} parent=1 // pred_check_branch
      %68 = sbr.rel (0) target = $region45
    $region44: #{rainbow_forward.1} parent=1 // pred_region
      %69 = dma.done [#allocation5], 1024
    $region45: #{rainbow_forward.1} parent=1 // pred_fallthru
      _
    // Predicated region
    $region46: #{rainbow_forward.1} parent=1 // pred_check
      _
    $region47: #{rainbow_forward.1} parent=1 // pred_check_branch
      %71 = sbr.rel (0) target = $region49
    $region48: #{rainbow_forward.1} parent=1 // pred_region
      %72 = dma.done [#allocation5], 2048
    $region49: #{rainbow_forward.1} parent=1 // pred_fallthru
      _
    %v74 = vld [vmem:[%s0] sm:$0xff]
    %v75 = vld [vmem:[%s0 + $0x8] sm:$0xff]
    %v76 = vld [vmem:[%s2] sm:$0x1]
    %v77 = vld [vmem:[%s1] sm:$0x1]
    %79 = vset.pattern.permute.xlu0 0
    %80 = vperm.xlu0 %79, %v74
    %v81 = vpop.permute.xlu0 %80
    %84 = vset.pattern.permute.xlu0 0
    %85 = vperm.xlu0 %84, %v75
    %v86 = vpop.permute.xlu0 %85
    %v88 = vlaneseq
    %v89 = vshrl.u32 %v88, 7
    %v90 = vsub.s32 0, %v89
    %v91 = vrot.slane %v77, %v90
    %v92 = vmul.f32 %v81, %v91
    %v93 = vmul.f32 %v86, %v91
    %v95 = vlaneseq
    %v96 = vshrl.u32 %v95, 7
    %v97 = vsub.s32 0, %v96
    %v98 = vrot.slane %v76, %v97
    %v100 = vadd.f32 %v98, %v92
    %v101 = vadd.f32 %v98, %v93
    %v102 = vld [vmem:[%s1 + $0x1] sm:$0x1]
    %103 = vset.pattern.permute.xlu0 1
    %104 = vperm.xlu0 %103, %v74
    %v105 = vpop.permute.xlu0 %104
    %107 = vset.pattern.permute.xlu0 1
    %108 = vperm.xlu0 %107, %v75
    %v109 = vpop.permute.xlu0 %108
    %v111 = vlaneseq
    %v112 = vshrl.u32 %v111, 7
    %v113 = vsub.s32 0, %v112
    %v114 = vrot.slane %v102, %v113
    %v115 = vmul.f32 %v105, %v114
    %v116 = vmul.f32 %v109, %v114
    %v117 = vadd.f32 %v100, %v115
    %v118 = vadd.f32 %v101, %v116
    %v119 = vld [vmem:[%s1 + $0x2] sm:$0x1]
    %120 = vset.pattern.permute.xlu0 2
    %121 = vperm.xlu0 %120, %v74
    %v122 = vpop.permute.xlu0 %121
    %124 = vset.pattern.permute.xlu0 2
    %125 = vperm.xlu0 %124, %v75
    %v126 = vpop.permute.xlu0 %125
    %v128 = vlaneseq
    %v129 = vshrl.u32 %v128, 7
    %v130 = vsub.s32 0, %v129
    %v131 = vrot.slane %v119, %v130
    %v132 = vmul.f32 %v122, %v131
    %v133 = vmul.f32 %v126, %v131
    %v134 = vadd.f32 %v117, %v132
    %v135 = vadd.f32 %v118, %v133
    %v136 = vld [vmem:[%s1 + $0x3] sm:$0x1]
    %137 = vset.pattern.permute.xlu0 3
    %138 = vperm.xlu0 %137, %v74
    %v139 = vpop.permute.xlu0 %138
    %141 = vset.pattern.permute.xlu0 3
    %142 = vperm.xlu0 %141, %v75
    %v143 = vpop.permute.xlu0 %142
    %v145 = vlaneseq
    %v146 = vshrl.u32 %v145, 7
    %v147 = vsub.s32 0, %v146
    %v148 = vrot.slane %v136, %v147
    %v149 = vmul.f32 %v139, %v148
    %v150 = vmul.f32 %v143, %v148
    %v151 = vadd.f32 %v134, %v149
    %v152 = vadd.f32 %v135, %v150
    %v153 = vmax.f32 %v151, 0.0
    %v154 = vmax.f32 %v152, 0.0
    %v155 = vpack.c.bf16 %v154, %v153
    %v156 = vld [vmem:[#allocation2] sm:$0xf]
    %v157 = vld [vmem:[#allocation2 + $0x4] sm:$0xf]
    %v158 = vld [vmem:[#allocation2 + $0x8] sm:$0xf]
    %v159 = vld [vmem:[#allocation2 + $0xc] sm:$0xf]
    %v160 = vld [vmem:[#allocation2 + $0x10] sm:$0xf]
    %v161 = vld [vmem:[#allocation2 + $0x14] sm:$0xf]
    %v162 = vld [vmem:[#allocation2 + $0x18] sm:$0xf]
    %v163 = vld [vmem:[#allocation2 + $0x1c] sm:$0xf]
    %v164 = vld [vmem:[#allocation2 + $0x20] sm:$0xf]
    %v165 = vld [vmem:[#allocation2 + $0x24] sm:$0xf]
    %v166 = vld [vmem:[#allocation2 + $0x28] sm:$0xf]
    %v167 = vld [vmem:[#allocation2 + $0x2c] sm:$0xf]
    %v168 = vld [vmem:[#allocation2 + $0x30] sm:$0xf]
    %v169 = vld [vmem:[#allocation2 + $0x34] sm:$0xf]
    %v170 = vld [vmem:[#allocation2 + $0x38] sm:$0xf]
    %v171 = vld [vmem:[#allocation2 + $0x3c] sm:$0xf]
    %v172 = vld [vmem:[%s4] sm:$0x1]
    %v174 = vlaneseq
    %v175 = vshrl.u32 %v174, 7
    %v176 = vsub.s32 0, %v175
    %v177 = vrot.slane %v172, %v176
    %v195 = vunpack.c.l.b16 %v156
    %v196 = vunpack.c.l.b16 %v157
    %v197 = vunpack.c.l.b16 %v158
    %v198 = vunpack.c.l.b16 %v159
    %v199 = vunpack.c.l.b16 %v160
    %v200 = vunpack.c.l.b16 %v161
    %v201 = vunpack.c.l.b16 %v162
    %v202 = vunpack.c.l.b16 %v163
    %v203 = vunpack.c.l.b16 %v164
    %v204 = vunpack.c.l.b16 %v165
    %v205 = vunpack.c.l.b16 %v166
    %v206 = vunpack.c.l.b16 %v167
    %v207 = vunpack.c.l.b16 %v168
    %v208 = vunpack.c.l.b16 %v169
    %v209 = vunpack.c.l.b16 %v170
    %v210 = vunpack.c.l.b16 %v171
    %v211 = vpack.c.b16 %v196, %v195
    %v212 = vpack.c.b16 %v198, %v197
    %v213 = vpack.c.b16 %v200, %v199
    %v214 = vpack.c.b16 %v202, %v201
    %v215 = vpack.c.b16 %v204, %v203
    %v216 = vpack.c.b16 %v206, %v205
    %v217 = vpack.c.b16 %v208, %v207
    %v218 = vpack.c.b16 %v210, %v209
    %227 = vmatprep.subr.bf16.mxu0 0
    %228 = vmatpush1.bf16.msra.mxu0 %v211
    %229 = vmatprep.subr.bf16.mxu0 0
    %230 = vmatpush1.bf16.msra.mxu0 %v212
    %231 = vmatprep.subr.bf16.mxu0 0
    %232 = vmatpush1.bf16.msra.mxu0 %v213
    %233 = vmatprep.subr.bf16.mxu0 0
    %234 = vmatpush1.bf16.msra.mxu0 %v214
    %235 = vmatprep.subr.bf16.mxu0 0
    %236 = vmatpush1.bf16.msra.mxu0 %v215
    %237 = vmatprep.subr.bf16.mxu0 0
    %238 = vmatpush1.bf16.msra.mxu0 %v216
    %239 = vmatprep.subr.bf16.mxu0 0
    %240 = vmatpush1.bf16.msra.mxu0 %v217
    %241 = vmatprep.subr.bf16.mxu0 0
    %242 = vmatpush1.bf16.msra.mxu0 %v218
    %243 = vmatprep.subr.bf16.mxu0 0
    %244 = vmatpush1.bf16.msra.mxu0 0
    %245 = vmatprep.subr.bf16.mxu0 0
    %246 = vmatpush1.bf16.msra.mxu0 0
    %247 = vmatprep.subr.bf16.mxu0 0
    %248 = vmatpush1.bf16.msra.mxu0 0
    %249 = vmatprep.subr.bf16.mxu0 0
    %250 = vmatpush1.bf16.msra.mxu0 0
    %251 = vmatprep.subr.bf16.mxu0 0
    %252 = vmatpush1.bf16.msra.mxu0 0
    %253 = vmatprep.subr.bf16.mxu0 0
    %254 = vmatpush1.bf16.msra.mxu0 0
    %255 = vmatprep.subr.bf16.mxu0 0
    %256 = vmatpush1.bf16.msra.mxu0 0
    %257 = vmatprep.subr.bf16.mxu0 0
    %258 = vmatpush1.bf16.msra.mxu0 0
    %259 = vmatprep.mubr.bf16.mxu0 0
    %260 = vmatmul.mubr.bf16.gmra.mrb[0].mxu0 %v155
    %v261 = vpop.f32.mrb[0].mxu0
    %v262 = vadd.f32 %v177, %v261
    %v263 = vpop.f32.mrb[0].mxu0
    %v264 = vpop.f32.mrb[0].mxu0
    %v265 = vadd.f32 %v177, %v264
    %v266 = vpop.f32.mrb[0].mxu0
    %267 = vdwg.mxu0
    %v268 = vmax.f32 %v262, 0.0
    %v269 = vmax.f32 %v265, 0.0
    %v270 = vpack.c.bf16 %v269, %v268
    %v271 = vld [vmem:[#allocation4] sm:$0xf]
    %v272 = vld [vmem:[#allocation4 + $0x4] sm:$0xf]
    %v273 = vld [vmem:[#allocation4 + $0x8] sm:$0xf]
    %v274 = vld [vmem:[#allocation4 + $0xc] sm:$0xf]
    %v275 = vld [vmem:[#allocation4 + $0x10] sm:$0xf]
    %v276 = vld [vmem:[#allocation4 + $0x14] sm:$0xf]
    %v277 = vld [vmem:[#allocation4 + $0x18] sm:$0xf]
    %v278 = vld [vmem:[#allocation4 + $0x1c] sm:$0xf]
    %v279 = vld [vmem:[#allocation4 + $0x20] sm:$0xf]
    %v280 = vld [vmem:[#allocation4 + $0x24] sm:$0xf]
    %v281 = vld [vmem:[#allocation4 + $0x28] sm:$0xf]
    %v282 = vld [vmem:[#allocation4 + $0x2c] sm:$0xf]
    %v283 = vld [vmem:[#allocation4 + $0x30] sm:$0xf]
    %v284 = vld [vmem:[#allocation4 + $0x34] sm:$0xf]
    %v285 = vld [vmem:[#allocation4 + $0x38] sm:$0xf]
    %v286 = vld [vmem:[#allocation4 + $0x3c] sm:$0xf]
    %v287 = vld [vmem:[%s6] sm:$0x1]
    %v289 = vlaneseq
    %v290 = vshrl.u32 %v289, 7
    %v291 = vsub.s32 0, %v290
    %v292 = vrot.slane %v287, %v291
    %v310 = vunpack.c.l.b16 %v271
    %v311 = vunpack.c.l.b16 %v272
    %v312 = vunpack.c.l.b16 %v273
    %v313 = vunpack.c.l.b16 %v274
    %v314 = vunpack.c.l.b16 %v275
    %v315 = vunpack.c.l.b16 %v276
    %v316 = vunpack.c.l.b16 %v277
    %v317 = vunpack.c.l.b16 %v278
    %v318 = vunpack.c.l.b16 %v279
    %v319 = vunpack.c.l.b16 %v280
    %v320 = vunpack.c.l.b16 %v281
    %v321 = vunpack.c.l.b16 %v282
    %v322 = vunpack.c.l.b16 %v283
    %v323 = vunpack.c.l.b16 %v284
    %v324 = vunpack.c.l.b16 %v285
    %v325 = vunpack.c.l.b16 %v286
    %v326 = vpack.c.b16 %v311, %v310
    %v327 = vpack.c.b16 %v313, %v312
    %v328 = vpack.c.b16 %v315, %v314
    %v329 = vpack.c.b16 %v317, %v316
    %v330 = vpack.c.b16 %v319, %v318
    %v331 = vpack.c.b16 %v321, %v320
    %v332 = vpack.c.b16 %v323, %v322
    %v333 = vpack.c.b16 %v325, %v324
    %342 = vmatprep.subr.bf16.mxu0 0
    %343 = vmatpush1.bf16.msra.mxu0 %v326
    %344 = vmatprep.subr.bf16.mxu0 0
    %345 = vmatpush1.bf16.msra.mxu0 %v327
    %346 = vmatprep.subr.bf16.mxu0 0
    %347 = vmatpush1.bf16.msra.mxu0 %v328
    %348 = vmatprep.subr.bf16.mxu0 0
    %349 = vmatpush1.bf16.msra.mxu0 %v329
    %350 = vmatprep.subr.bf16.mxu0 0
    %351 = vmatpush1.bf16.msra.mxu0 %v330
    %352 = vmatprep.subr.bf16.mxu0 0
    %353 = vmatpush1.bf16.msra.mxu0 %v331
    %354 = vmatprep.subr.bf16.mxu0 0
    %355 = vmatpush1.bf16.msra.mxu0 %v332
    %356 = vmatprep.subr.bf16.mxu0 0
    %357 = vmatpush1.bf16.msra.mxu0 %v333
    %358 = vmatprep.subr.bf16.mxu0 0
    %359 = vmatpush1.bf16.msra.mxu0 0
    %360 = vmatprep.subr.bf16.mxu0 0
    %361 = vmatpush1.bf16.msra.mxu0 0
    %362 = vmatprep.subr.bf16.mxu0 0
    %363 = vmatpush1.bf16.msra.mxu0 0
    %364 = vmatprep.subr.bf16.mxu0 0
    %365 = vmatpush1.bf16.msra.mxu0 0
    %366 = vmatprep.subr.bf16.mxu0 0
    %367 = vmatpush1.bf16.msra.mxu0 0
    %368 = vmatprep.subr.bf16.mxu0 0
    %369 = vmatpush1.bf16.msra.mxu0 0
    %370 = vmatprep.subr.bf16.mxu0 0
    %371 = vmatpush1.bf16.msra.mxu0 0
    %372 = vmatprep.subr.bf16.mxu0 0
    %373 = vmatpush1.bf16.msra.mxu0 0
    %374 = vmatprep.mubr.bf16.mxu0 0
    %375 = vmatmul.mubr.bf16.gmra.mrb[0].mxu0 %v270
    %v376 = vpop.f32.mrb[0].mxu0
    %v377 = vadd.f32 %v292, %v376
    %v378 = vpop.f32.mrb[0].mxu0
    %v379 = vpop.f32.mrb[0].mxu0
    %v380 = vadd.f32 %v292, %v379
    %v381 = vpop.f32.mrb[0].mxu0
    %382 = vdwg.mxu0
    %v383 = vmax.f32 %v377, 0.0
    %v384 = vmax.f32 %v380, 0.0
    %v385 = vpack.c.bf16 %v384, %v383
    %v386 = vld [vmem:[#allocation6] sm:$0xff]
    %v387 = vld [vmem:[#allocation6 + $0x8] sm:$0xff]
    %v388 = vld [vmem:[#allocation6 + $0x10] sm:$0xff]
    %v389 = vld [vmem:[#allocation6 + $0x18] sm:$0xff]
    %v390 = vld [vmem:[#allocation6 + $0x20] sm:$0xff]
    %v391 = vld [vmem:[#allocation6 + $0x28] sm:$0xff]
    %v392 = vld [vmem:[#allocation6 + $0x30] sm:$0xff]
    %v393 = vld [vmem:[#allocation6 + $0x38] sm:$0xff]
    %v394 = vld [vmem:[#allocation6 + $0x40] sm:$0xff]
    %v395 = vld [vmem:[#allocation6 + $0x48] sm:$0xff]
    %v396 = vld [vmem:[#allocation6 + $0x50] sm:$0xff]
    %v397 = vld [vmem:[#allocation6 + $0x58] sm:$0xff]
    %v398 = vld [vmem:[#allocation6 + $0x60] sm:$0xff]
    %v399 = vld [vmem:[#allocation6 + $0x68] sm:$0xff]
    %v400 = vld [vmem:[#allocation6 + $0x70] sm:$0xff]
    %v401 = vld [vmem:[#allocation6 + $0x78] sm:$0xff]
    %v402 = vld [vmem:[%s8] sm:$0x3]
    %v404 = vlaneseq
    %v405 = vshrl.u32 %v404, 7
    %v406 = vsub.s32 0, %v405
    %v407 = vrot.slane %v402, %v406
    %v408 = vlaneseq
    %v409 = vshrl.u32 %v408, 7
    %v410 = vsub.s32 1, %v409
    %v411 = vrot.slane %v402, %v410
    %v430 = vunpack.c.l.b16 %v386
    %v431 = vunpack.c.h.b16 %v386
    %v432 = vunpack.c.l.b16 %v387
    %v433 = vunpack.c.h.b16 %v387
    %v434 = vunpack.c.l.b16 %v388
    %v435 = vunpack.c.h.b16 %v388
    %v436 = vunpack.c.l.b16 %v389
    %v437 = vunpack.c.h.b16 %v389
    %v438 = vunpack.c.l.b16 %v390
    %v439 = vunpack.c.h.b16 %v390
    %v440 = vunpack.c.l.b16 %v391
    %v441 = vunpack.c.h.b16 %v391
    %v442 = vunpack.c.l.b16 %v392
    %v443 = vunpack.c.h.b16 %v392
    %v444 = vunpack.c.l.b16 %v393
    %v445 = vunpack.c.h.b16 %v393
    %v446 = vunpack.c.l.b16 %v394
    %v447 = vunpack.c.h.b16 %v394
    %v448 = vunpack.c.l.b16 %v395
    %v449 = vunpack.c.h.b16 %v395
    %v450 = vunpack.c.l.b16 %v396
    %v451 = vunpack.c.h.b16 %v396
    %v452 = vunpack.c.l.b16 %v397
    %v453 = vunpack.c.h.b16 %v397
    %v454 = vunpack.c.l.b16 %v398
    %v455 = vunpack.c.h.b16 %v398
    %v456 = vunpack.c.l.b16 %v399
    %v457 = vunpack.c.h.b16 %v399
    %v458 = vunpack.c.l.b16 %v400
    %v459 = vunpack.c.h.b16 %v400
    %v460 = vunpack.c.l.b16 %v401
    %v461 = vunpack.c.h.b16 %v401
    %v462 = vpack.c.b16 %v432, %v430
    %v463 = vpack.c.b16 %v433, %v431
    %v464 = vpack.c.b16 %v436, %v434
    %v465 = vpack.c.b16 %v437, %v435
    %v466 = vpack.c.b16 %v440, %v438
    %v467 = vpack.c.b16 %v441, %v439
    %v468 = vpack.c.b16 %v444, %v442
    %v469 = vpack.c.b16 %v445, %v443
    %v470 = vpack.c.b16 %v448, %v446
    %v471 = vpack.c.b16 %v449, %v447
    %v472 = vpack.c.b16 %v452, %v450
    %v473 = vpack.c.b16 %v453, %v451
    %v474 = vpack.c.b16 %v456, %v454
    %v475 = vpack.c.b16 %v457, %v455
    %v476 = vpack.c.b16 %v460, %v458
    %v477 = vpack.c.b16 %v461, %v459
    %494 = vmatprep.subr.bf16.mxu0 %v463
    %495 = vmatpush1.bf16.msra.mxu0 %v462
    %496 = vmatprep.subr.bf16.mxu0 %v465
    %497 = vmatpush1.bf16.msra.mxu0 %v464
    %498 = vmatprep.subr.bf16.mxu0 %v467
    %499 = vmatpush1.bf16.msra.mxu0 %v466
    %500 = vmatprep.subr.bf16.mxu0 %v469
    %501 = vmatpush1.bf16.msra.mxu0 %v468
    %502 = vmatprep.subr.bf16.mxu0 %v471
    %503 = vmatpush1.bf16.msra.mxu0 %v470
    %504 = vmatprep.subr.bf16.mxu0 %v473
    %505 = vmatpush1.bf16.msra.mxu0 %v472
    %506 = vmatprep.subr.bf16.mxu0 %v475
    %507 = vmatpush1.bf16.msra.mxu0 %v474
    %508 = vmatprep.subr.bf16.mxu0 %v477
    %509 = vmatpush1.bf16.msra.mxu0 %v476
    %510 = vmatprep.subr.bf16.mxu0 0
    %511 = vmatpush1.bf16.msra.mxu0 0
    %512 = vmatprep.subr.bf16.mxu0 0
    %513 = vmatpush1.bf16.msra.mxu0 0
    %514 = vmatprep.subr.bf16.mxu0 0
    %515 = vmatpush1.bf16.msra.mxu0 0
    %516 = vmatprep.subr.bf16.mxu0 0
    %517 = vmatpush1.bf16.msra.mxu0 0
    %518 = vmatprep.subr.bf16.mxu0 0
    %519 = vmatpush1.bf16.msra.mxu0 0
    %520 = vmatprep.subr.bf16.mxu0 0
    %521 = vmatpush1.bf16.msra.mxu0 0
    %522 = vmatprep.subr.bf16.mxu0 0
    %523 = vmatpush1.bf16.msra.mxu0 0
    %524 = vmatprep.subr.bf16.mxu0 0
    %525 = vmatpush1.bf16.msra.mxu0 0
    %526 = vmatprep.mubr.bf16.mxu0 0
    %527 = vmatmul.mubr.bf16.gmra.mrb[0].mxu0 %v385
    %v528 = vpop.f32.mrb[0].mxu0
    %v529 = vadd.f32 %v407, %v528
    %v530 = vpop.f32.mrb[0].mxu0
    %v531 = vadd.f32 %v411, %v530
    %v532 = vpop.f32.mrb[0].mxu0
    %v533 = vadd.f32 %v407, %v532
    %v534 = vpop.f32.mrb[0].mxu0
    %v535 = vadd.f32 %v411, %v534
    %536 = vdwg.mxu0
    %537 = vmax.xlane.f32.xlu0 %v529
    %v538 = vpop.xlane.xlu0 %537
    %539 = vmax.xlane.f32.xlu0 %v533
    %v540 = vpop.xlane.xlu0 %539
    %v541 = vsub.f32 %v529, %v538
    %v542 = vsub.f32 %v533, %v540
    %v543 = vmul.f32 %v541, 1.442695
    %v544 = vpow.pop %v543
    %v545 = vmul.f32 %v542, 1.442695
    %v546 = vpow.pop %v545
    %547 = vadd.xlane.f32.xlu0 %v544
    %v548 = vpop.xlane.xlu0 %547
    %549 = vadd.xlane.f32.xlu0 %v546
    %v550 = vpop.xlane.xlu0 %549
    %v551 = vrcp.pop %v548
    %v552 = vmul.f32 %v544, %v551
    %v553 = vrcp.pop %v550
    %v554 = vmul.f32 %v546, %v553
    %v555 = vpack.c.bf16 %v554, %v552
    %v557 = vunpack.c.l.b16 %v555
    %v558 = vunpack.c.h.b16 %v555
    %v559 = vpack.c.b16 %v557, %v557
    %v560 = vpack.c.b16 %v558, %v558
    %563 = vst [vmem:[%s9] sm:$0xf] %v559
    %564 = vst [vmem:[%s9 + $0x8] sm:$0xf] %v560
    %565 = vmax.xlane.f32.xlu0 %v531
    %v566 = vpop.xlane.xlu0 %565
    %567 = vmax.xlane.f32.xlu0 %v535
    %v568 = vpop.xlane.xlu0 %567
    %v569 = vsub.f32 %v531, %v566
    %v570 = vsub.f32 %v535, %v568
    %v571 = vmul.f32 %v569, 1.442695
    %v572 = vpow.pop %v571
    %v573 = vmul.f32 %v570, 1.442695
    %v574 = vpow.pop %v573
    %575 = vadd.xlane.f32.xlu0 %v572
    %v576 = vpop.xlane.xlu0 %575
    %577 = vadd.xlane.f32.xlu0 %v574
    %v578 = vpop.xlane.xlu0 %577
    %v579 = vrcp.pop %v576
    %v580 = vmul.f32 %v572, %v579
    %v581 = vrcp.pop %v578
    %v582 = vmul.f32 %v574, %v581
    %v583 = vpack.c.bf16 %v582, %v580
    %v585 = vunpack.c.l.b16 %v583
    %v586 = vunpack.c.h.b16 %v583
    %v587 = vpack.c.b16 %v585, %v585
    %v588 = vpack.c.b16 %v586, %v586
    %591 = vst [vmem:[%s9 + $0x4] sm:$0xf] %v587
    %592 = vst [vmem:[%s9 + $0xc] sm:$0xf] %v588
    // Predicated region
    $region50: #{rainbow_forward.1} parent=1 // pred_check
      _
    $region51: #{rainbow_forward.1} parent=1 // pred_check_branch
      %594 = sbr.rel (0) target = $region53
    $region52: #{rainbow_forward.1} parent=1 // pred_region
      _
    $region53: #{rainbow_forward.1} parent=1 // pred_fallthru
      _
    // Predicated region
    $region54: #{rainbow_forward.1} parent=1 // pred_check
      _
    $region55: #{rainbow_forward.1} parent=1 // pred_check_branch
      %596 = sbr.rel (0) target = $region57
    $region56: #{rainbow_forward.1} parent=1 // pred_region
      _
    $region57: #{rainbow_forward.1} parent=1 // pred_fallthru
      _
    %597 = vsyncpa [#allocation3], 1
    %598 = vsyncpa [#allocation5], 1

</llo_original>
